<compile_context>
chip_gen: v7x
topology: tpu7x:2x2x1
jax: 0.10.0
libtpu: 0.0.40
codegen_flags: <defaults>
</compile_context>

<pallas_src>
import functools

import jax
import jax.numpy as jnp
from jax.experimental import pallas as pl
from jax.experimental.pallas import tpu as pltpu

_LANE = 128
_DEFAULT_BLOCK_ROWS = 4096  # (4096, 128) f32 = 2 MiB per input block; tunable.


def _round_up(x, m):
    return ((x + m - 1) // m) * m


def _sublane_pack(dtype):
    """Sublane packing requirement for a block's second-to-last dim."""
    return max(8, 32 // jnp.dtype(dtype).itemsize)  # f32->8, bf16->16, int8->32


def _dice_kernel(x_ref, t_ref, out_ref, num_acc, den_acc, *, smooth, tail_valid):
    """Streams row-tiles, keeping (8,128) f32 partial-sum accumulators in VMEM,
    and producing the scalar dice loss on the last grid step."""
    i = pl.program_id(0)
    last = pl.num_programs(0) - 1

    @pl.when(i == 0)
    def _():
        num_acc[...] = jnp.zeros_like(num_acc)
        den_acc[...] = jnp.zeros_like(den_acc)

    x = x_ref[...].astype(jnp.float32)
    t = t_ref[...].astype(jnp.float32)
    # Sigmoid in tanh form: the transcendental goes to the EUP, only a
    # mul + fused add remain on the VALU (no f32 divide sequence).
    s = 0.5 * jnp.tanh(0.5 * x) + 0.5

    br, lane = s.shape
    groups = br // 8  # br is always a multiple of 8 (wrapper guarantees it)

    # All-but-last steps: cross-vreg tree sum into a single (8,128) vreg per
    # accumulator (pure VALU adds, no XLU, ~1 vreg of accumulator VMEM RMW).
    @pl.when(i < last)
    def _():
        num_acc[...] += jnp.sum((s * t).reshape(groups, 8, lane), axis=0)
        den_acc[...] += jnp.sum((s + t).reshape(groups, 8, lane), axis=0)

    # Last step: mask the ragged tail (local to this tile, statically baked
    # valid count -> no int32 global-index overflow), then do the single final
    # cross-lane/sublane reduction and write the scalar loss.
    @pl.when(i == last)
    def _():
        row = jax.lax.broadcasted_iota(jnp.int32, (br, lane), 0)
        col = jax.lax.broadcasted_iota(jnp.int32, (br, lane), 1)
        valid = (row * lane + col) < tail_valid
        sm = jnp.where(valid, s, 0.0)
        tm = jnp.where(valid, t, 0.0)
        num_p = num_acc[...] + jnp.sum((sm * tm).reshape(groups, 8, lane), axis=0)
        den_p = den_acc[...] + jnp.sum((sm + tm).reshape(groups, 8, lane), axis=0)
        num = jnp.sum(num_p)
        den = jnp.sum(den_p)
        dice = (2.0 * num + smooth) / (den + smooth)
        out_ref[0, 0] = 1.0 - dice


def dice_loss(inputs, targets, smooth=1.0, block_rows=_DEFAULT_BLOCK_ROWS):
    """Pallas implementation of DiceLoss.forward (scalar f32 result).

    Inputs/targets may be any float/int dtype; they travel over HBM in their
    native dtype (pass bf16 logits / int8 masks for a ~2x bandwidth win) and
    are cast to f32 inside the kernel.
    """
    x = inputs.reshape(-1)
    t = targets.reshape(-1)
    total = int(x.shape[0])

    # Tiny (<128 element) zero-pad only when the flat size is not lane-aligned;
    # padded positions are masked in-kernel anyway.
    rem = total % _LANE
    if rem:
        pad = _LANE - rem
        x = jnp.pad(x, (0, pad))
        t = jnp.pad(t, (0, pad))
    rows = x.shape[0] // _LANE

    # Row-tile size: multiple of the dtype's sublane packing, never grossly
    # larger than the array itself (small inputs get a single exact-fit block).
    pack = max(_sublane_pack(x.dtype), _sublane_pack(t.dtype))
    br = min(int(block_rows), _round_up(rows, pack))
    br = _round_up(max(br, pack), pack)
    n_blocks = pl.cdiv(rows, br)

    # Valid element count inside the last (possibly partial) row-tile, as a
    # static Python int (fits int32 for any sane br).
    tail_valid = total - (n_blocks - 1) * br * _LANE

    x2 = x.reshape(rows, _LANE)
    t2 = t.reshape(rows, _LANE)

    kernel = functools.partial(
        _dice_kernel, smooth=float(smooth), tail_valid=int(tail_valid)
    )

    out = pl.pallas_call(
        kernel,
        out_shape=jax.ShapeDtypeStruct((1, 1), jnp.float32),
        grid_spec=pltpu.PrefetchScalarGridSpec(
            num_scalar_prefetch=0,
            grid=(n_blocks,),
            in_specs=[
                pl.BlockSpec((br, _LANE), lambda i: (i, 0)),
                pl.BlockSpec((br, _LANE), lambda i: (i, 0)),
            ],
            out_specs=pl.BlockSpec(
                (1, 1), lambda i: (0, 0), memory_space=pltpu.MemorySpace.SMEM
            ),
            scratch_shapes=[
                pltpu.VMEM((8, _LANE), jnp.float32),  # numerator partials
                pltpu.VMEM((8, _LANE), jnp.float32),  # denominator partials
            ],
        ),
        compiler_params=pltpu.CompilerParams(
            dimension_semantics=("arbitrary",),
            vmem_limit_bytes=32 * 1024 * 1024,
        ),
    )(x2, t2)
    return out[0, 0]


def _dice_loss_ref(inputs, targets, smooth=1.0):
    s = jax.nn.sigmoid(inputs.astype(jnp.float32))
    t = targets.astype(jnp.float32)
    num = jnp.sum(s * t)
    den = jnp.sum(s) + jnp.sum(t)
    return 1.0 - (2.0 * num + smooth) / (den + smooth)


if __name__ == "__main__":
    key = jax.random.PRNGKey(0)
    k1, k2 = jax.random.split(key)

    # Segmentation logits / binary-mask pair (NCHW).
    inputs = jax.random.normal(k1, (2, 4, 16, 16), dtype=jnp.float32)
    targets = (jax.random.uniform(k2, (2, 4, 16, 16)) > 0.5).astype(jnp.float32)

    loss = jax.block_until_ready(dice_loss(inputs, targets))
    ref = jax.block_until_ready(_dice_loss_ref(inputs, targets))

    assert jnp.allclose(loss, ref, atol=1e-4, rtol=1e-4), (loss, ref)
    print("KERNEL_OK")
</pallas_src>

<mosaic_0001>
module attributes {stable_mosaic.version = 11 : i64} {
  func.func @_dice_kernel(%arg0: i32, %arg1: memref<16x128xf32, #tpu.memory_space<vmem>>, %arg2: memref<16x128xf32, #tpu.memory_space<vmem>>, %arg3: memref<1x1xf32, #tpu.memory_space<smem>>, %arg4: memref<8x128xf32, #tpu.memory_space<vmem>>, %arg5: memref<8x128xf32, #tpu.memory_space<vmem>>) attributes {dimension_semantics = [#tpu.dimension_semantics<arbitrary>], iteration_bounds = array<i64: 1>, scalar_prefetch = 0 : i64, scratch_operands = 2 : i64, tpu.core_type = #tpu.core_type<tc>, window_params = [{transform_indices = @transform_0, window_bounds = array<i64: 16, 128>}, {transform_indices = @transform_1, window_bounds = array<i64: 16, 128>}, {transform_indices = @transform_2, window_bounds = array<i64: 1, 1>}]} {
    %c0_i32 = arith.constant 0 : i32
    %0 = arith.cmpi eq, %arg0, %c0_i32 : i32
    %1 = arith.extui %0 : i1 to i32
    %c0_i32_0 = arith.constant 0 : i32
    %2 = arith.cmpi ne, %1, %c0_i32_0 : i32
    scf.if %2 {
      %cst_10 = arith.constant 0.000000e+00 : f32
      %18 = vector.broadcast %cst_10 : f32 to vector<8x128xf32>
      %c0_11 = arith.constant 0 : index
      %c0_12 = arith.constant 0 : index
      %19 = vector.load %arg4[%c0_11, %c0_12] : memref<8x128xf32, #tpu.memory_space<vmem>>, vector<8x128xf32>
      tpu.vector_store %arg4[%c0_11, %c0_12], %18 {strides = array<i32>} : memref<8x128xf32, #tpu.memory_space<vmem>>, vector<8x128xf32>,
      %cst_13 = arith.constant 0.000000e+00 : f32
      %20 = vector.broadcast %cst_13 : f32 to vector<8x128xf32>
      %c0_14 = arith.constant 0 : index
      %c0_15 = arith.constant 0 : index
      %21 = vector.load %arg5[%c0_14, %c0_15] : memref<8x128xf32, #tpu.memory_space<vmem>>, vector<8x128xf32>
      tpu.vector_store %arg5[%c0_14, %c0_15], %20 {strides = array<i32>} : memref<8x128xf32, #tpu.memory_space<vmem>>, vector<8x128xf32>,
    } else {
    }
    %c0 = arith.constant 0 : index
    %c0_1 = arith.constant 0 : index
    %3 = vector.load %arg1[%c0, %c0_1] : memref<16x128xf32, #tpu.memory_space<vmem>>, vector<16x128xf32>
    %c0_2 = arith.constant 0 : index
    %c0_3 = arith.constant 0 : index
    %4 = vector.load %arg2[%c0_2, %c0_3] : memref<16x128xf32, #tpu.memory_space<vmem>>, vector<16x128xf32>
    %cst = arith.constant 5.000000e-01 : f32
    %5 = vector.broadcast %cst : f32 to vector<16x128xf32>
    %6 = arith.mulf %5, %3 : vector<16x128xf32>
    %7 = math.tanh %6 : vector<16x128xf32>
    %cst_4 = arith.constant 5.000000e-01 : f32
    %8 = vector.broadcast %cst_4 : f32 to vector<16x128xf32>
    %9 = arith.mulf %8, %7 : vector<16x128xf32>
    %cst_5 = arith.constant 5.000000e-01 : f32
    %10 = vector.broadcast %cst_5 : f32 to vector<16x128xf32>
    %11 = arith.addf %9, %10 : vector<16x128xf32>
    %c0_i32_6 = arith.constant 0 : i32
    %12 = arith.cmpi slt, %arg0, %c0_i32_6 : i32
    %13 = arith.extui %12 : i1 to i32
    %c0_i32_7 = arith.constant 0 : i32
    %14 = arith.cmpi ne, %13, %c0_i32_7 : i32
    scf.if %14 {
      %c0_10 = arith.constant 0 : index
      %c0_11 = arith.constant 0 : index
      %18 = vector.load %arg4[%c0_10, %c0_11] : memref<8x128xf32, #tpu.memory_space<vmem>>, vector<8x128xf32>
      %19 = arith.mulf %11, %4 : vector<16x128xf32>
      %20 = vector.shape_cast %19 : vector<16x128xf32> to vector<2x8x128xf32>
      %cst_12 = arith.constant dense<0.000000e+00> : vector<8x128xf32>
      %21 = vector.multi_reduction <add>, %20, %cst_12 [0] : vector<2x8x128xf32> to vector<8x128xf32>
      %22 = arith.addf %18, %21 : vector<8x128xf32>
      %c0_13 = arith.constant 0 : index
      %c0_14 = arith.constant 0 : index
      %23 = vector.load %arg4[%c0_13, %c0_14] : memref<8x128xf32, #tpu.memory_space<vmem>>, vector<8x128xf32>
      tpu.vector_store %arg4[%c0_13, %c0_14], %22 {strides = array<i32>} : memref<8x128xf32, #tpu.memory_space<vmem>>, vector<8x128xf32>,
      %c0_15 = arith.constant 0 : index
      %c0_16 = arith.constant 0 : index
      %24 = vector.load %arg5[%c0_15, %c0_16] : memref<8x128xf32, #tpu.memory_space<vmem>>, vector<8x128xf32>
      %25 = arith.addf %11, %4 : vector<16x128xf32>
      %26 = vector.shape_cast %25 : vector<16x128xf32> to vector<2x8x128xf32>
      %cst_17 = arith.constant dense<0.000000e+00> : vector<8x128xf32>
      %27 = vector.multi_reduction <add>, %26, %cst_17 [0] : vector<2x8x128xf32> to vector<8x128xf32>
      %28 = arith.addf %24, %27 : vector<8x128xf32>
      %c0_18 = arith.constant 0 : index
      %c0_19 = arith.constant 0 : index
      %29 = vector.load %arg5[%c0_18, %c0_19] : memref<8x128xf32, #tpu.memory_space<vmem>>, vector<8x128xf32>
      tpu.vector_store %arg5[%c0_18, %c0_19], %28 {strides = array<i32>} : memref<8x128xf32, #tpu.memory_space<vmem>>, vector<8x128xf32>,
    } else {
    }
    %c0_i32_8 = arith.constant 0 : i32
    %15 = arith.cmpi eq, %arg0, %c0_i32_8 : i32
    %16 = arith.extui %15 : i1 to i32
    %c0_i32_9 = arith.constant 0 : i32
    %17 = arith.cmpi ne, %16, %c0_i32_9 : i32
    scf.if %17 {
      %18 = tpu.iota {dimensions = array<i32: 0>} : vector<16x128xi32>
      %19 = tpu.iota {dimensions = array<i32: 1>} : vector<16x128xi32>
      %c128_i32 = arith.constant 128 : i32
      %20 = vector.broadcast %c128_i32 : i32 to vector<16x128xi32>
      %21 = arith.muli %18, %20 : vector<16x128xi32>
      %22 = arith.addi %21, %19 : vector<16x128xi32>
      %c2048_i32 = arith.constant 2048 : i32
      %23 = vector.broadcast %c2048_i32 : i32 to vector<16x128xi32>
      %24 = arith.cmpi slt, %22, %23 : vector<16x128xi32>
      %cst_10 = arith.constant 0.000000e+00 : f32
      %25 = vector.broadcast %cst_10 : f32 to vector<16x128xf32>
      %26 = arith.select %24, %11, %25 : vector<16x128xi1>, vector<16x128xf32>
      %cst_11 = arith.constant 0.000000e+00 : f32
      %27 = vector.broadcast %cst_11 : f32 to vector<16x128xf32>
      %28 = arith.select %24, %4, %27 : vector<16x128xi1>, vector<16x128xf32>
      %c0_12 = arith.constant 0 : index
      %c0_13 = arith.constant 0 : index
      %29 = vector.load %arg4[%c0_12, %c0_13] : memref<8x128xf32, #tpu.memory_space<vmem>>, vector<8x128xf32>
      %30 = arith.mulf %26, %28 : vector<16x128xf32>
      %31 = vector.shape_cast %30 : vector<16x128xf32> to vector<2x8x128xf32>
      %cst_14 = arith.constant dense<0.000000e+00> : vector<8x128xf32>
      %32 = vector.multi_reduction <add>, %31, %cst_14 [0] : vector<2x8x128xf32> to vector<8x128xf32>
      %33 = arith.addf %29, %32 : vector<8x128xf32>
      %c0_15 = arith.constant 0 : index
      %c0_16 = arith.constant 0 : index
      %34 = vector.load %arg5[%c0_15, %c0_16] : memref<8x128xf32, #tpu.memory_space<vmem>>, vector<8x128xf32>
      %35 = arith.addf %26, %28 : vector<16x128xf32>
      %36 = vector.shape_cast %35 : vector<16x128xf32> to vector<2x8x128xf32>
      %cst_17 = arith.constant dense<0.000000e+00> : vector<8x128xf32>
      %37 = vector.multi_reduction <add>, %36, %cst_17 [0] : vector<2x8x128xf32> to vector<8x128xf32>
      %38 = arith.addf %34, %37 : vector<8x128xf32>
      %39 = vector.shape_cast %33 : vector<8x128xf32> to vector<1x8x128xf32>
      %cst_18 = arith.constant dense<0.000000e+00> : vector<1xf32>
      %40 = vector.multi_reduction <add>, %39, %cst_18 [1, 2] : vector<1x8x128xf32> to vector<1xf32>
      %41 = vector.shape_cast %40 : vector<1xf32> to vector<1x1x1xf32>
      %42 = vector.extract %41[0, 0, 0] : f32 from vector<1x1x1xf32>
      %43 = vector.shape_cast %38 : vector<8x128xf32> to vector<1x8x128xf32>
      %cst_19 = arith.constant dense<0.000000e+00> : vector<1xf32>
      %44 = vector.multi_reduction <add>, %43, %cst_19 [1, 2] : vector<1x8x128xf32> to vector<1xf32>
      %45 = vector.shape_cast %44 : vector<1xf32> to vector<1x1x1xf32>
      %46 = vector.extract %45[0, 0, 0] : f32 from vector<1x1x1xf32>
      %cst_20 = arith.constant 2.000000e+00 : f32
      %47 = arith.mulf %cst_20, %42 : f32
      %cst_21 = arith.constant 1.000000e+00 : f32
      %48 = arith.addf %47, %cst_21 : f32
      %cst_22 = arith.constant 1.000000e+00 : f32
      %49 = arith.addf %46, %cst_22 : f32
      %50 = arith.divf %48, %49 : f32
      %cst_23 = arith.constant 1.000000e+00 : f32
      %51 = arith.subf %cst_23, %50 : f32
      %c0_24 = arith.constant 0 : index
      %c0_25 = arith.constant 0 : index
      %52 = memref.load %arg3[%c0_24, %c0_25] : memref<1x1xf32, #tpu.memory_space<smem>>
      memref.store %51, %arg3[%c0_24, %c0_25] : memref<1x1xf32, #tpu.memory_space<smem>>
    } else {
    }
    return
  }
  func.func @transform_0(%arg0: i32) -> (i32, i32) {
    %c0_i32 = arith.constant 0 : i32
    %c0_i32_0 = arith.constant 0 : i32
    return %arg0, %c0_i32 : i32, i32
  }
  func.func @transform_1(%arg0: i32) -> (i32, i32) {
    %c0_i32 = arith.constant 0 : i32
    %c0_i32_0 = arith.constant 0 : i32
    return %arg0, %c0_i32 : i32, i32
  }
  func.func @transform_2(%arg0: i32) -> (i32, i32) {
    %c0_i32 = arith.constant 0 : i32
    %c0_i32_0 = arith.constant 0 : i32
    %c0_i32_1 = arith.constant 0 : i32
    return %c0_i32, %c0_i32_0 : i32, i32
  }
}

</mosaic_0001>

<llo_original>
// kernel: tpu_custom_call.1
$region0: #{tpu_custom_call.1}
  #allocation0 [shape = 'u32[]', space=smem, size = 0x4, offset = 0x4, fixed_abs, tag = 'smem constant byte address 0x4 - core index']
  #allocation1 [shape = 'u32[144,128]{1,0:T(1,128)}', space=vmem, size = 0x12000, scoped, tag = 'internal scratch']
  #allocation2 [shape = 'f32[8,128]{1,0:T(8,128)}', space=vmem, size = 0x1000, scoped, tag = 'scratch operand']
  #allocation3 [shape = 'f32[8,128]{1,0:T(8,128)}', space=vmem, size = 0x1000, scoped, tag = 'scratch operand']
  %s0 = inlined_call_operand.hbm [shape: f32[16,128], index: 0, kind: input, shape index: {}]
  %s1 = inlined_call_operand.hbm [shape: f32[16,128], index: 1, kind: input, shape index: {}]
  %s2 = inlined_call_operand.hbm [shape: f32[1,1], index: 2, kind: output, shape index: {}]
  %s3 = sld [smem:[#allocation0]]
  $region38: #{tpu_custom_call.1} parent=0
    _
  %s5 = ssub.s32 1, %s3
  %s6 = scalar_select 0, %s5, %s3
  $region1: #{tpu_custom_call.1} parent=0
    #allocation4 [shape = 'u8[8192]{0}', space=vmem, size = 0x2000, scoped, tag = 'input window, operand 0, single buffered']
    #allocation5 [shape = 's32[1]{0}', space=sflag, size = 0x4, scoped, tag = 'scoped memory for tpu_custom_call.1']
    #allocation6 [shape = 's32[1]{0}', space=sflag, size = 0x4, scoped, tag = 'scoped memory for tpu_custom_call.1']
    #allocation7 [shape = 'u8[8192]{0}', space=vmem, size = 0x2000, scoped, tag = 'input window, operand 1, single buffered']
    #allocation8 [shape = 's32[1]{0}', space=sflag, size = 0x4, scoped, tag = 'scoped memory for tpu_custom_call.1']
    #allocation9 [shape = 'u8[512]{0}', space=smem, size = 0x200, scoped, tag = 'output window, operand 0, single buffered']
    %7 = vsyncpa [#allocation5], 0
    %8 = vsyncpa [#allocation8], 0
    %9 = vsyncpa [#allocation6], 0
    // Predicated region
    $region2: #{tpu_custom_call.1} parent=1 // pred_check
      _
    $region3: #{tpu_custom_call.1} parent=1 // pred_check_branch
      %11 = sbr.rel (0) target = $region5
    $region4: #{tpu_custom_call.1} parent=1 // pred_region
      %s13 = ssub.s32 256, 256
      %14 = vsyncadd [#allocation5], %s13
      %s15 = sshll.u32 [#allocation4], 4
      %s16 = int_to_ptr.vmem [resolvable:$true] %s15
      %21 = dma.hbm_to_vmem [thread:$0]  %s0, 256, %s16, [#allocation5], 128, 128, 8
    $region5: #{tpu_custom_call.1} parent=1 // pred_fallthru
      _
    // Predicated region
    $region6: #{tpu_custom_call.1} parent=1 // pred_check
      _
    $region7: #{tpu_custom_call.1} parent=1 // pred_check_branch
      %23 = sbr.rel (0) target = $region9
    $region8: #{tpu_custom_call.1} parent=1 // pred_region
      %s25 = ssub.s32 256, 256
      %26 = vsyncadd [#allocation8], %s25
      %s27 = sshll.u32 [#allocation7], 4
      %s28 = int_to_ptr.vmem [resolvable:$true] %s27
      %33 = dma.hbm_to_vmem [thread:$0]  %s1, 256, %s28, [#allocation8], 128, 128, 8
    $region9: #{tpu_custom_call.1} parent=1 // pred_fallthru
      _
    // Predicated region
    $region10: #{tpu_custom_call.1} parent=1 // pred_check
      _
    $region11: #{tpu_custom_call.1} parent=1 // pred_check_branch
      %35 = sbr.rel (0) target = $region13
    $region12: #{tpu_custom_call.1} parent=1 // pred_region
      %36 = dma.done [#allocation5], 256
    $region13: #{tpu_custom_call.1} parent=1 // pred_fallthru
      _
    // Predicated region
    $region14: #{tpu_custom_call.1} parent=1 // pred_check
      _
    $region15: #{tpu_custom_call.1} parent=1 // pred_check_branch
      %38 = sbr.rel (0) target = $region17
    $region16: #{tpu_custom_call.1} parent=1 // pred_region
      %39 = dma.done [#allocation8], 256
    $region17: #{tpu_custom_call.1} parent=1 // pred_fallthru
      _
    %p40 = scmp.eq.s32.totalorder 0, 0
    // Predicated region
    $region18: #{tpu_custom_call.1} parent=1 // pred_check
      %p41 = pneg %p40
    $region19: #{tpu_custom_call.1} parent=1 // pred_check_branch
      %43 = sbr.rel (%p41) target = $region21
    $region20: #{tpu_custom_call.1} parent=1 // pred_region
      %44 = vst [vmem:[#allocation2] sm:$0xff] 0.0
      %45 = vst [vmem:[#allocation3] sm:$0xff] 0.0
    $region21: #{tpu_custom_call.1} parent=1 // pred_fallthru
      _
    %v46 = vld [vmem:[#allocation4] sm:$0xff]
    %v47 = vld [vmem:[#allocation4 + $0x8] sm:$0xff]
    %v48 = vld [vmem:[#allocation7] sm:$0xff]
    %v49 = vld [vmem:[#allocation7 + $0x8] sm:$0xff]
    %v50 = vmul.f32 %v46, 0.5
    %v51 = vmul.f32 %v47, 0.5
    %v52 = vtanh.pop %v50
    %v53 = vtanh.pop %v51
    %v54 = vmul.f32 %v52, 0.5
    %v55 = vmul.f32 %v53, 0.5
    %v56 = vadd.f32 %v54, 0.5
    %v57 = vadd.f32 %v55, 0.5
    %p58 = scmp.lt.s32.totalorder 0, 0
    // Predicated region
    $region22: #{tpu_custom_call.1} parent=1 // pred_check
      %p59 = pneg %p58
    $region23: #{tpu_custom_call.1} parent=1 // pred_check_branch
      %61 = sbr.rel (%p59) target = $region25
    $region24: #{tpu_custom_call.1} parent=1 // pred_region
      %v62 = vld [vmem:[#allocation2] sm:$0xff]
      %v63 = vmul.f32 %v56, %v48
      %v64 = vmul.f32 %v57, %v49
      %v65 = vadd.f32 %v63, %v64
      %v66 = vadd.f32 %v62, %v65
      %67 = vst [vmem:[#allocation2] sm:$0xff] %v66
      %v68 = vld [vmem:[#allocation3] sm:$0xff]
      %v69 = vadd.f32 %v56, %v48
      %v70 = vadd.f32 %v57, %v49
      %v71 = vadd.f32 %v69, %v70
      %v72 = vadd.f32 %v68, %v71
      %73 = vst [vmem:[#allocation3] sm:$0xff] %v72
    $region25: #{tpu_custom_call.1} parent=1 // pred_fallthru
      _
    // Predicated region
    $region26: #{tpu_custom_call.1} parent=1 // pred_check
      %p74 = pneg %p40
    $region27: #{tpu_custom_call.1} parent=1 // pred_check_branch
      %76 = sbr.rel (%p74) target = $region29
    $region28: #{tpu_custom_call.1} parent=1 // pred_region
      %v77 = vlaneseq
      %v78 = vshrl.u32 %v77, 7
      %v79 = vadd.s32 %v78, 8
      %v80 = vlaneseq
      %v81 = vand.u32 %v80, 127
      %v82 = vmul.u32 %v78, 128
      %v83 = vmul.u32 %v79, 128
      %v84 = vadd.s32 %v82, %v81
      %v85 = vadd.s32 %v83, %v81
      %vm86 = vcmp.lt.s32.totalorder %v84, 2048
      %vm87 = vcmp.lt.s32.totalorder %v85, 2048
      %v88 = vsel %vm86, %v56, 0.0
      %v89 = vsel %vm87, %v57, 0.0
      %v90 = vsel %vm86, %v48, 0.0
      %v91 = vsel %vm87, %v49, 0.0
      %v92 = vld [vmem:[#allocation2] sm:$0xff]
      %v93 = vmul.f32 %v88, %v90
      %v94 = vmul.f32 %v89, %v91
      %v95 = vadd.f32 %v93, %v94
      %v96 = vadd.f32 %v92, %v95
      %v97 = vld [vmem:[#allocation3] sm:$0xff]
      %v98 = vadd.f32 %v88, %v90
      %v99 = vadd.f32 %v89, %v91
      %v100 = vadd.f32 %v98, %v99
      %v101 = vadd.f32 %v97, %v100
      %102 = vadd.xlane.f32.xlu0 %v96
      %v103 = vpop.xlane.xlu0 %102
      %v104 = vrot.slane %v103, 4
      %v105 = vadd.f32 %v103, %v104
      %v106 = vrot.slane %v105, 2
      %v107 = vadd.f32 %v105, %v106
      %v108 = vrot.slane %v107, 1
      %v109 = vadd.f32 %v107, %v108
      %s110 = vtos %v109
      %111 = vadd.xlane.f32.xlu0 %v101
      %v112 = vpop.xlane.xlu0 %111
      %v113 = vrot.slane %v112, 4
      %v114 = vadd.f32 %v112, %v113
      %v115 = vrot.slane %v114, 2
      %v116 = vadd.f32 %v114, %v115
      %v117 = vrot.slane %v116, 1
      %v118 = vadd.f32 %v116, %v117
      %s119 = vtos %v118
      %s120 = smul.f32 %s110, 2.0
      %s121 = sadd.f32 %s120, 1.0
      %s122 = sadd.f32 %s119, 1.0
      %v123 = vstv %s122
      %v124 = vrcp.pop %v123
      %s125 = vtos %v124
      %s126 = smul.f32 %s121, %s125
      %s127 = ssub.f32 1.0, %s126
      %s128 = scalar_lea.smem [#allocation9], 0
      %129 = sst [smem:[%s128]] %s127
    $region29: #{tpu_custom_call.1} parent=1 // pred_fallthru
      _
    // Predicated region
    $region30: #{tpu_custom_call.1} parent=1 // pred_check
      _
    $region31: #{tpu_custom_call.1} parent=1 // pred_check_branch
      %131 = sbr.rel (0) target = $region33
    $region32: #{tpu_custom_call.1} parent=1 // pred_region
      %s133 = ssub.s32 16, 16
      %134 = vsyncadd [#allocation6], %s133
      %137 = dma.smem_to_hbm [#allocation9], 16, %s2, [#allocation6]
    $region33: #{tpu_custom_call.1} parent=1 // pred_fallthru
      _
    // Predicated region
    $region34: #{tpu_custom_call.1} parent=1 // pred_check
      _
    $region35: #{tpu_custom_call.1} parent=1 // pred_check_branch
      %139 = sbr.rel (0) target = $region37
    $region36: #{tpu_custom_call.1} parent=1 // pred_region
      %140 = dma.done [#allocation6], 16
    $region37: #{tpu_custom_call.1} parent=1 // pred_fallthru
      _
    %141 = sfence
    %142 = vsyncpa [#allocation5], 1
    %143 = vsyncpa [#allocation8], 1
    %144 = vsyncpa [#allocation6], 1

</llo_original>
